<compile_context>
chip_gen: v7x
topology: tpu7x:2x2x1
jax: 0.10.0
libtpu: 0.0.40
codegen_flags: <defaults>
</compile_context>

<pallas_src>
import jax
import jax.numpy as jnp
from jax.experimental import pallas as pl
from jax.experimental.pallas import tpu as pltpu

_LANE = 128
_MAX_TILE = 8192                      # lane cap; >2K lanes is already past the roofline knee
_VMEM_WORKING_SET = 16 * 1024 * 1024  # double-buffered in+out(+noise) budget; fits v5e/v6e/v7x


def _cdiv(a, b):
    return -(-a // b)


def _round_up(n, m):
    return _cdiv(n, m) * m


# ---------------------------------------------------------------------------
# In-kernel gaussian noise (TPU hardware PRNG + Box-Muller).
# ---------------------------------------------------------------------------
def _uniform_01(shape):
    """Uniform [0,1) from raw PRNG bits (23-bit mantissa trick; no int->float convert)."""
    bits = pltpu.bitcast(pltpu.prng_random_bits(shape), jnp.uint32)
    f = pltpu.bitcast((bits >> 9) | jnp.uint32(0x3F800000), jnp.float32)
    return f - 1.0


def _standard_normal(shape):
    """Exact N(0,1) via Box-Muller (prng_seed must be called first).

    log/sqrt/cos go to the EUP slot, so this is nearly free next to the HBM stream.
    """
    u1 = 1.0 - _uniform_01(shape)          # (0, 1]  -> log is finite
    u2 = _uniform_01(shape)                # [0, 1)
    r = jnp.sqrt(-2.0 * jnp.log(u1))
    return r * jnp.cos((2.0 * jnp.pi) * u2)


# ---------------------------------------------------------------------------
# Kernels
# ---------------------------------------------------------------------------
def _noise_injection_fixed_kernel(x_ref, w_ref, n_ref, o_ref):
    # x/o: (1, C, T), w: (1, ch, 1), n: (1, 1, T) -- pure VPU broadcast mul + add.
    x = x_ref[...].astype(jnp.float32)
    w = w_ref[...].astype(jnp.float32)
    n = n_ref[...].astype(jnp.float32)          # dtype cast fused here, not as an HBM pass
    o_ref[...] = (x + w * n).astype(o_ref.dtype)


def _noise_injection_rng_kernel(x_ref, w_ref, seed_ref, o_ref):
    # x/o: (1, C, T), w: (1, ch, 1), seed: (1,) int32 in SMEM.
    t = x_ref.shape[-1]
    b = pl.program_id(0)
    j = pl.program_id(1)
    # Multi-word seed (base, batch, tile): unique, order-independent stream per
    # (batch, spatial tile) -> deterministic regardless of grid order / megacore sharding.
    pltpu.prng_seed(seed_ref[0], b, j)
    n = _standard_normal((1, t))                # one spatial noise map shared by all channels
    x = x_ref[...].astype(jnp.float32)
    w = w_ref[...].astype(jnp.float32)
    o_ref[...] = (x + w * n).astype(o_ref.dtype)


# ---------------------------------------------------------------------------
# Tiling
# ---------------------------------------------------------------------------
def _pick_hw_tile(HW, C, itemsize, has_noise_stream, want_min_tiles=1):
    """Largest 128-multiple lane tile whose double-buffered working set fits the budget.

    Prefers a tile that evenly divides the 128-padded extent (balanced, unmasked stores),
    but only searches down to max(512, cap // 2) lanes; below that we keep the big tile
    and accept one ragged (masked) last tile.
    """
    lane_cols = 2 * C + (1 if has_noise_stream else 0)          # x + out (+ noise) columns
    budget_tile = (_VMEM_WORKING_SET // (2 * lane_cols * itemsize)) // _LANE * _LANE
    cap = max(_LANE, min(budget_tile, _MAX_TILE))
    if want_min_tiles > 1:
        # Force >= want_min_tiles grid steps (v7x megacore), keeping 128-multiple tiles.
        cap = max(_LANE, min(cap, _round_up(_cdiv(HW, want_min_tiles), _LANE)))
    if HW <= cap:
        return HW                                               # single full-extent block
    hw128 = _round_up(HW, _LANE)
    lo = max(4 * _LANE, cap // 2)
    for t in range(cap, lo - 1, -_LANE):
        if hw128 % t == 0:
            return t
    return cap                                                  # ragged masked last tile


# ---------------------------------------------------------------------------
# Wrapper
# ---------------------------------------------------------------------------
def noise_injection(x, weight, noise=None, *, seed=0, donate_x=False):
    """Pallas TPU forward of NoiseInjection: out = x + weight * noise.

    x:      (B, C, H, W)
    weight: (1, ch, 1, 1) with ch in {1, C}
    noise:  optional fixed noise (B, 1, H, W) or (1, 1, H, W) -> the `fixed_noise` path.
            If None (module default), fresh gaussian noise is generated
            (in-kernel TPU PRNG on TPU backends, jax.random.normal otherwise).
    """
    B, C, H, W = x.shape
    ch = weight.shape[1]
    assert weight.shape == (1, ch, 1, 1) and ch in (1, C), weight.shape
    HW = H * W
    dtype = x.dtype
    itemsize = jnp.dtype(dtype).itemsize

    # pltpu.prng_seed / prng_random_bits only lower on the TPU (Mosaic) backend.
    use_inkernel_rng = (noise is None) and (jax.default_backend() == "tpu")
    if noise is None and not use_inkernel_rng:
        # CPU / interpret fallback: draw the fresh noise with the standard JAX RNG.
        noise = jax.random.normal(jax.random.PRNGKey(seed), (B, 1, H, W), dtype=jnp.float32)
    if noise is not None:
        assert noise.shape in ((B, 1, H, W), (1, 1, H, W)), noise.shape

    want_min_tiles = 2 if B == 1 else 1          # let v7x megacore shard single-image calls
    hw_tile = _pick_hw_tile(HW, C, itemsize, has_noise_stream=noise is not None,
                            want_min_tiles=want_min_tiles)
    num_tiles = _cdiv(HW, hw_tile)
    grid = (B, num_tiles)

    x2 = x.reshape(B, C, HW)
    w2 = weight.reshape(1, ch, 1)                # broadcast over C and lanes inside the kernel

    x_spec = pl.BlockSpec((1, C, hw_tile), lambda b, j: (b, 0, j))
    w_spec = pl.BlockSpec((1, ch, 1), lambda b, j: (0, 0, 0))     # resident across the grid
    out_spec = pl.BlockSpec((1, C, hw_tile), lambda b, j: (b, 0, j))

    flops = 2 * B * C * HW
    bytes_accessed = 2 * B * C * HW * itemsize + ch * jnp.dtype(weight.dtype).itemsize
    transcendentals = 0
    if use_inkernel_rng:
        transcendentals = 3 * B * num_tiles * hw_tile             # log + sqrt + cos per draw
    else:
        bytes_accessed += int(noise.shape[0]) * HW * jnp.dtype(noise.dtype).itemsize

    common = dict(
        out_shape=jax.ShapeDtypeStruct((B, C, HW), dtype),
        out_specs=out_spec,
        grid=grid,
        compiler_params=pltpu.CompilerParams(
            dimension_semantics=("parallel", "parallel"),
            vmem_limit_bytes=32 * 1024 * 1024),
        cost_estimate=pl.CostEstimate(flops=flops, transcendentals=transcendentals,
                                      bytes_accessed=bytes_accessed),
        # Only beneficial when the caller actually donates x (otherwise XLA inserts a copy).
        input_output_aliases={0: 0} if donate_x else {},
    )

    if use_inkernel_rng:
        # TODO(synk): torch.randn's RNG stream cannot be reproduced bit-exactly; noise is
        # drawn from the TPU hardware PRNG instead (same distribution, deterministic per seed).
        seed_arr = jnp.asarray([seed], dtype=jnp.int32)
        out = pl.pallas_call(
            _noise_injection_rng_kernel,
            in_specs=[x_spec, w_spec,
                      pl.BlockSpec(memory_space=pltpu.MemorySpace.SMEM)],
            **common,
        )(x2, w2, seed_arr)
    else:
        nb = noise.shape[0]
        n2 = noise.reshape(nb, 1, HW)            # no broadcast / cast materialised in HBM
        if nb == B:
            n_spec = pl.BlockSpec((1, 1, hw_tile), lambda b, j: (b, 0, j))
        else:                                    # shared (1,1,H,W) map: re-read same block
            n_spec = pl.BlockSpec((1, 1, hw_tile), lambda b, j: (0, 0, j))
        out = pl.pallas_call(
            _noise_injection_fixed_kernel,
            in_specs=[x_spec, w_spec, n_spec],
            **common,
        )(x2, w2, n2)

    return out.reshape(B, C, H, W)


# TODO(synk): small-C (<8) shapes still pad the sublane axis; a 2D (B*C, HW) fast path
# would help tiny layers but real StyleGAN layers (C >= 32) are unaffected.


if __name__ == "__main__":
    key = jax.random.PRNGKey(0)
    kx, kn, kx2, kn2, kx4, kn4 = jax.random.split(key, 6)

    # ---- Case 1: fresh-noise path (module default, fixed_noise=None), per-channel scale.
    B, C, H, W = 2, 4, 16, 16
    x = jax.random.normal(kx, (B, C, H, W), dtype=jnp.float32)
    # PyTorch initializes weight to zeros; use deterministic nonzero scales so the
    # injected-noise path is actually exercised (and safely invertible for the check).
    weight = ((jnp.arange(C, dtype=jnp.float32) + 1.0) * 0.1).reshape(1, C, 1, 1)

    out = jax.block_until_ready(noise_injection(x, weight, seed=1234))
    assert out.shape == x.shape and out.dtype == x.dtype
    assert bool(jnp.all(jnp.isfinite(out)))
    # The injected map must be the SAME spatial noise on every channel, scaled by w_c.
    n_hat = (out - x) / weight
    n0 = n_hat[:, :1]
    assert jnp.allclose(n_hat, jnp.broadcast_to(n0, n_hat.shape), atol=1e-3, rtol=1e-3)
    # And it should look like standard gaussian noise (512 samples; very loose bounds).
    m, s = float(jnp.mean(n0)), float(jnp.std(n0))
    assert abs(m) < 0.25 and abs(s - 1.0) < 0.25, (m, s)

    # ---- Case 2: fixed-noise path, shared scale (ch=1), shared (1,1,H,W) noise map,
    #      non-128-multiple spatial extent (single full-extent block).
    B2, C2, H2, W2 = 2, 3, 12, 12
    x2 = jax.random.normal(kx2, (B2, C2, H2, W2), dtype=jnp.float32)
    w_shared = jnp.full((1, 1, 1, 1), 0.3, dtype=jnp.float32)
    fixed = jax.random.normal(kn2, (1, 1, H2, W2), dtype=jnp.float32)     # fixed_noise
    out2 = jax.block_until_ready(noise_injection(x2, w_shared, noise=fixed))
    ref2 = x2 + w_shared * fixed
    assert jnp.allclose(out2, ref2, atol=1e-6, rtol=1e-6)

    # ---- Case 3: fixed-noise path at the canonical shape, per-channel scale (exact check).
    noise3 = jax.random.normal(kn, (B, 1, H, W), dtype=jnp.float32)
    out3 = jax.block_until_ready(noise_injection(x, weight, noise=noise3))
    ref3 = x + weight * noise3
    assert jnp.allclose(out3, ref3, atol=1e-6, rtol=1e-6)

    # ---- Case 4: B=1 -> forced 2-way spatial split (v7x megacore path) with a ragged
    #      masked last tile (HW = 576, tile = 384).
    B4, C4, H4, W4 = 1, 4, 24, 24
    x4 = jax.random.normal(kx4, (B4, C4, H4, W4), dtype=jnp.float32)
    n4 = jax.random.normal(kn4, (B4, 1, H4, W4), dtype=jnp.float32)
    w4 = jnp.full((1, 1, 1, 1), 0.5, dtype=jnp.float32)
    out4 = jax.block_until_ready(noise_injection(x4, w4, noise=n4))
    ref4 = x4 + w4 * n4
    assert jnp.allclose(out4, ref4, atol=1e-6, rtol=1e-6)

    print("KERNEL_OK")
</pallas_src>

<mosaic_0001>
module attributes {stable_mosaic.version = 11 : i64} {
  func.func @_noise_injection_fixed_kernel(%arg0: i32, %arg1: i32, %arg2: memref<1x4x256xf32, #tpu.memory_space<vmem>>, %arg3: memref<1x4x1xf32, #tpu.memory_space<vmem>>, %arg4: memref<1x1x256xf32, #tpu.memory_space<vmem>>, %arg5: memref<1x4x256xf32, #tpu.memory_space<vmem>>) attributes {dimension_semantics = [#tpu.dimension_semantics<parallel>, #tpu.dimension_semantics<parallel>], iteration_bounds = array<i64: 2, 1>, scalar_prefetch = 0 : i64, scratch_operands = 0 : i64, tpu.core_type = #tpu.core_type<tc>, window_params = [{transform_indices = @transform_0, window_bounds = array<i64: 1, 4, 256>}, {pipeline_mode = #tpu.pipeline_mode<synchronous>, transform_indices = @transform_1, window_bounds = array<i64: 1, 4, 1>}, {transform_indices = @transform_2, window_bounds = array<i64: 1, 1, 256>}, {transform_indices = @transform_3, window_bounds = array<i64: 1, 4, 256>}]} {
    %c0 = arith.constant 0 : index
    %c0_0 = arith.constant 0 : index
    %c0_1 = arith.constant 0 : index
    %0 = vector.load %arg2[%c0, %c0_0, %c0_1] : memref<1x4x256xf32, #tpu.memory_space<vmem>>, vector<1x4x256xf32>
    %c0_2 = arith.constant 0 : index
    %c0_3 = arith.constant 0 : index
    %c0_4 = arith.constant 0 : index
    %1 = vector.load %arg3[%c0_2, %c0_3, %c0_4] : memref<1x4x1xf32, #tpu.memory_space<vmem>>, vector<1x4x1xf32>
    %c0_5 = arith.constant 0 : index
    %c0_6 = arith.constant 0 : index
    %c0_7 = arith.constant 0 : index
    %2 = vector.load %arg4[%c0_5, %c0_6, %c0_7] : memref<1x1x256xf32, #tpu.memory_space<vmem>>, vector<1x1x256xf32>
    %3 = vector.broadcast %1 : vector<1x4x1xf32> to vector<1x4x256xf32>
    %4 = vector.broadcast %2 : vector<1x1x256xf32> to vector<1x4x256xf32>
    %5 = arith.mulf %3, %4 : vector<1x4x256xf32>
    %6 = arith.addf %0, %5 : vector<1x4x256xf32>
    %c0_8 = arith.constant 0 : index
    %c0_9 = arith.constant 0 : index
    %c0_10 = arith.constant 0 : index
    %7 = vector.load %arg5[%c0_8, %c0_9, %c0_10] : memref<1x4x256xf32, #tpu.memory_space<vmem>>, vector<1x4x256xf32>
    tpu.vector_store %arg5[%c0_8, %c0_9, %c0_10], %6 {strides = array<i32>} : memref<1x4x256xf32, #tpu.memory_space<vmem>>, vector<1x4x256xf32>,
    return
  }
  func.func @transform_0(%arg0: i32, %arg1: i32) -> (i32, i32, i32) {
    %c0_i32 = arith.constant 0 : i32
    %c0_i32_0 = arith.constant 0 : i32
    return %arg0, %c0_i32, %arg1 : i32, i32, i32
  }
  func.func @transform_1(%arg0: i32, %arg1: i32) -> (i32, i32, i32) {
    %c0_i32 = arith.constant 0 : i32
    %c0_i32_0 = arith.constant 0 : i32
    %c0_i32_1 = arith.constant 0 : i32
    %c0_i32_2 = arith.constant 0 : i32
    return %c0_i32, %c0_i32_0, %c0_i32_1 : i32, i32, i32
  }
  func.func @transform_2(%arg0: i32, %arg1: i32) -> (i32, i32, i32) {
    %c0_i32 = arith.constant 0 : i32
    %c0_i32_0 = arith.constant 0 : i32
    return %arg0, %c0_i32, %arg1 : i32, i32, i32
  }
  func.func @transform_3(%arg0: i32, %arg1: i32) -> (i32, i32, i32) {
    %c0_i32 = arith.constant 0 : i32
    %c0_i32_0 = arith.constant 0 : i32
    return %arg0, %c0_i32, %arg1 : i32, i32, i32
  }
}

</mosaic_0001>

<llo_original>
// kernel: tpu_custom_call.1
$region0: #{tpu_custom_call.1}
  #allocation0 [shape = 'u32[]', space=smem, size = 0x4, offset = 0x4, fixed_abs, tag = 'smem constant byte address 0x4 - core index']
  #allocation1 [shape = 'u32[144,128]{1,0:T(1,128)}', space=vmem, size = 0x12000, scoped, tag = 'internal scratch']
  %s0 = inlined_call_operand.hbm [shape: f32[2,4,256], index: 0, kind: input, shape index: {}]
  %s1 = inlined_call_operand.vmem [shape: f32[1,4,1], index: 1, kind: input, shape index: {}]
  %s2 = inlined_call_operand.vmem [shape: f32[2,1,256], index: 2, kind: input, shape index: {}]
  %s3 = inlined_call_operand.hbm [shape: f32[2,4,256], index: 3, kind: output, shape index: {}]
  %s4 = sld [smem:[#allocation0]]
  $region49: #{tpu_custom_call.1} parent=0
    _
  %s6 = ssub.s32 1, %s4
  %s7 = scalar_select 0, %s6, %s4
  $region1: #{tpu_custom_call.1} parent=0
    #allocation2 [shape = 'u8[8192]{0}', space=vmem, size = 0x2000, scoped, tag = 'input window, operand 0']
    #allocation3 [shape = 's32[2]{0}', space=sflag, size = 0x8, scoped, tag = 'scoped memory for tpu_custom_call.1']
    #allocation4 [shape = 's32[2]{0}', space=sflag, size = 0x8, scoped, tag = 'scoped memory for tpu_custom_call.1']
    #allocation5 [shape = 'u8[8192]{0}', space=vmem, size = 0x2000, scoped, tag = 'output window, operand 0']
    %8 = vsyncpa [#allocation3], 0
    %s9 = scalar_lea.sflag [#allocation3], 1
    %10 = vsyncpa %s9, 0
    %11 = vsyncpa [#allocation4], 0
    %s12 = scalar_lea.sflag [#allocation4], 1
    %13 = vsyncpa %s12, 0
    loop: start=0, step=1, limit=4
    $region2: #{tpu_custom_call.1} parent=1 // loop_pre_header
      _
    $region3: #{tpu_custom_call.1} parent=1 // loop_header
      %s15 = sphi 0, %s19
      %p16 = scmp.ge.s32.totalorder %s15, 4
      %s22 = sphi 0, %s34
      %s23 = sphi 0, %s30
      %s24 = sphi 0, %s22
      %s25 = sphi 0, %s23
      %s26 = sphi 0, %s24
      %s27 = sphi 0, %s25
      %s39 = sphi 0, %s41
      %s42 = sphi 0, %s39
      %s43 = sphi 0, %s42
      %s59 = sphi 0, %s43
      %s63 = sphi 0, %s63
      %s65 = sphi 0, %s63
      %s66 = sphi 0, %s65
      %s80 = sphi 0, %s66
      %s88 = sphi 0, %s90
      %s91 = sphi 0, %s88
      %s92 = sphi 0, %s91
      %s108 = sphi 0, %s92
      %s116 = sphi 0, %s118
      %s119 = sphi 0, %s116
      %s120 = sphi 0, %s119
      %s136 = sphi 0, %s120
    $region4: #{tpu_custom_call.1} parent=1 // loop_header_branch
      %18 = sbr.rel (%p16) target = $region8
    $region5: #{tpu_custom_call.1} parent=1 // loop_body
      %s20 = ssub.s32 %s15, 1
      %s21 = ssub.s32 %s15, 2
      %s28 = sadd.s32 1, %s23
      %p29 = scmp.ge.s32.totalorder %s28, 1
      %s30 = scalar_select %p29, 0, %s28
      %s31 = sadd.s32 1, %s22
      %s32 = scalar_select %p29, %s31, %s22
      %p33 = scmp.ge.s32.totalorder %s32, 2
      %s34 = scalar_select %p33, 0, %s32
      %s35 = ssub.s32 %s22, %s34
      %s36 = ssub.s32 %s23, %s30
      %s37 = sor.u32 %s35, %s36
      %p38 = scmp.eq.s32.totalorder %s37, 0
      %s40 = sadd.s32 %s39, 1
      %s41 = scalar_select %p38, %s39, %s40
      %p44 = pneg %p38
      %p45 = scmp.eq.s32.totalorder %s15, 1
      %p46 = por %p44, %p45
      %p47 = scmp.ne.s32.totalorder %s39, %s42
      %p48 = scmp.eq.s32.totalorder %s15, 0
      %p49 = por %p47, %p48
      %p50 = scmp.ne.s32.totalorder %s39, %s42
      %p51 = scmp.eq.s32.totalorder %s20, 1
      %p52 = por %p50, %p51
      %p53 = scmp.ne.s32.totalorder %s42, %s43
      %p54 = scmp.eq.s32.totalorder %s20, 0
      %p55 = por %p53, %p54
      %p56 = scmp.ne.s32.totalorder %s42, %s43
      %p57 = scmp.eq.s32.totalorder %s21, 1
      %p58 = por %p56, %p57
      %p60 = scmp.ne.s32.totalorder %s43, %s59
      %p61 = scmp.eq.s32.totalorder %s21, 0
      %p62 = por %p60, %p61
      %s64 = sadd.s32 %s63, 1
      %p67 = scmp.eq.s32.totalorder %s15, 1
      %p68 = scmp.ne.s32.totalorder %s63, %s65
      %p69 = scmp.eq.s32.totalorder %s15, 0
      %p70 = por %p68, %p69
      %p71 = scmp.ne.s32.totalorder %s63, %s65
      %p72 = scmp.eq.s32.totalorder %s20, 1
      %p73 = por %p71, %p72
      %p74 = scmp.ne.s32.totalorder %s65, %s66
      %p75 = scmp.eq.s32.totalorder %s20, 0
      %p76 = por %p74, %p75
      %p77 = scmp.ne.s32.totalorder %s65, %s66
      %p78 = scmp.eq.s32.totalorder %s21, 1
      %p79 = por %p77, %p78
      %p81 = scmp.ne.s32.totalorder %s66, %s80
      %p82 = scmp.eq.s32.totalorder %s21, 0
      %p83 = por %p81, %p82
      %s84 = ssub.s32 %s22, %s34
      %s85 = ssub.s32 %s23, %s30
      %s86 = sor.u32 %s84, %s85
      %p87 = scmp.eq.s32.totalorder %s86, 0
      %s89 = sadd.s32 %s88, 1
      %s90 = scalar_select %p87, %s88, %s89
      %p93 = pneg %p87
      %p94 = scmp.eq.s32.totalorder %s15, 1
      %p95 = por %p93, %p94
      %p96 = scmp.ne.s32.totalorder %s88, %s91
      %p97 = scmp.eq.s32.totalorder %s15, 0
      %p98 = por %p96, %p97
      %p99 = scmp.ne.s32.totalorder %s88, %s91
      %p100 = scmp.eq.s32.totalorder %s20, 1
      %p101 = por %p99, %p100
      %p102 = scmp.ne.s32.totalorder %s91, %s92
      %p103 = scmp.eq.s32.totalorder %s20, 0
      %p104 = por %p102, %p103
      %p105 = scmp.ne.s32.totalorder %s91, %s92
      %p106 = scmp.eq.s32.totalorder %s21, 1
      %p107 = por %p105, %p106
      %p109 = scmp.ne.s32.totalorder %s92, %s108
      %p110 = scmp.eq.s32.totalorder %s21, 0
      %p111 = por %p109, %p110
      %s112 = ssub.s32 %s22, %s34
      %s113 = ssub.s32 %s23, %s30
      %s114 = sor.u32 %s112, %s113
      %p115 = scmp.eq.s32.totalorder %s114, 0
      %s117 = sadd.s32 %s116, 1
      %s118 = scalar_select %p115, %s116, %s117
      %p121 = pneg %p115
      %p122 = scmp.eq.s32.totalorder %s15, 1
      %p123 = por %p121, %p122
      %p124 = scmp.ne.s32.totalorder %s116, %s119
      %p125 = scmp.eq.s32.totalorder %s15, 0
      %p126 = por %p124, %p125
      %p127 = scmp.ne.s32.totalorder %s116, %s119
      %p128 = scmp.eq.s32.totalorder %s20, 1
      %p129 = por %p127, %p128
      %p130 = scmp.ne.s32.totalorder %s119, %s120
      %p131 = scmp.eq.s32.totalorder %s20, 0
      %p132 = por %p130, %p131
      %p133 = scmp.ne.s32.totalorder %s119, %s120
      %p134 = scmp.eq.s32.totalorder %s21, 1
      %p135 = por %p133, %p134
      %p137 = scmp.ne.s32.totalorder %s120, %s136
      %p138 = scmp.eq.s32.totalorder %s21, 0
      %p139 = por %p137, %p138
      %p140 = scmp.le.s32.totalorder 1, %s15
      %p141 = scmp.lt.s32.totalorder %s15, 3
      %p142 = pnand %p140, %p141
      %p143 = pneg %p142
      // Predicated region
      $region9: #{tpu_custom_call.1} parent=5 // pred_check
        _
      $region10: #{tpu_custom_call.1} parent=5 // pred_check_branch
        %145 = sbr.rel (%p142) target = $region12
      $region11: #{tpu_custom_call.1} parent=5 // pred_region
        %s146 = ssub.s32 %s15, 1
        // Predicated region
        $region13: #{tpu_custom_call.1} parent=11 // pred_check
          %p147 = pneg %p76
        $region14: #{tpu_custom_call.1} parent=11 // pred_check_branch
          %149 = sbr.rel (%p147) target = $region16
        $region15: #{tpu_custom_call.1} parent=11 // pred_region
          _
        $region16: #{tpu_custom_call.1} parent=11 // pred_fallthru
          _
      $region12: #{tpu_custom_call.1} parent=5 // pred_fallthru
        _
      %p150 = scmp.lt.s32.totalorder %s15, 2
      // Predicated region
      $region17: #{tpu_custom_call.1} parent=5 // pred_check
        %p151 = pneg %p150
      $region18: #{tpu_custom_call.1} parent=5 // pred_check_branch
        %153 = sbr.rel (%p151) target = $region20
      $region19: #{tpu_custom_call.1} parent=5 // pred_region
        // Predicated region
        $region21: #{tpu_custom_call.1} parent=19 // pred_check
          %p154 = pneg %p49
        $region22: #{tpu_custom_call.1} parent=19 // pred_check_branch
          %156 = sbr.rel (%p154) target = $region24
        $region23: #{tpu_custom_call.1} parent=19 // pred_region
          %s157 = sand.u32 %s39, 1
          %s158 = scalar_lea.sflag [#allocation3], %s157
          %s159 = sand.u32 %s39, 1
          %s160 = smul.addr %s159, 8
          %s161 = scalar_lea.vmem [#allocation2], %s160
          %s162 = smul.u32 2, %s23
          %s164 = ssub.s32 128, 128
          %165 = vsyncadd %s158, %s164
          %s166 = smul.addr %s22, 2
          %s167 = sadd.s32 %s162, %s166
          %s168 = smul.addr %s167, 64
          %s169 = scalar_lea.hbm %s0, %s168
          %s171 = sshll.u32 %s161, 4
          %s172 = int_to_ptr.vmem [resolvable:$true] %s171
          %174 = dma.hbm_to_vmem [thread:$0]  %s169, 128, %s172, %s158
        $region24: #{tpu_custom_call.1} parent=19 // pred_fallthru
          _
        // Predicated region
        $region25: #{tpu_custom_call.1} parent=19 // pred_check
          %p175 = pneg %p98
        $region26: #{tpu_custom_call.1} parent=19 // pred_check_branch
          %177 = sbr.rel (%p175) target = $region28
        $region27: #{tpu_custom_call.1} parent=19 // pred_region
          %s178 = smul.u32 2, %s23
          %p179 = scmp.lt.s32.totalorder %s22, 1
          %s180 = scalar_select %p179, %s22, 1
          %p181 = scmp.lt.s32.totalorder %s178, 1
          %s182 = scalar_select %p181, %s178, 1
          %s183 = smul.addr %s180, 2
          %s184 = sadd.s32 %s182, %s183
          %s185 = scalar_lea.vmem %s2, %s184
          %s186 = smul.u32 2, %s23
        $region28: #{tpu_custom_call.1} parent=19 // pred_fallthru
          _
      $region20: #{tpu_custom_call.1} parent=5 // pred_fallthru
        _
      %p187 = scmp.le.s32.totalorder 1, %s15
      %p188 = scmp.lt.s32.totalorder %s15, 3
      %p189 = pnand %p187, %p188
      %p190 = pneg %p189
      // Predicated region
      $region29: #{tpu_custom_call.1} parent=5 // pred_check
        _
      $region30: #{tpu_custom_call.1} parent=5 // pred_check_branch
        %192 = sbr.rel (%p189) target = $region32
      $region31: #{tpu_custom_call.1} parent=5 // pred_region
        %s193 = ssub.s32 %s15, 1
        %s194 = sand.u32 %s42, 1
        %s195 = scalar_lea.sflag [#allocation3], %s194
        %s196 = sand.u32 %s42, 1
        %s197 = smul.addr %s196, 8
        %s198 = scalar_lea.vmem [#allocation2], %s197
        // Predicated region
        $region33: #{tpu_custom_call.1} parent=31 // pred_check
          %p199 = pneg %p55
        $region34: #{tpu_custom_call.1} parent=31 // pred_check_branch
          %201 = sbr.rel (%p199) target = $region36
        $region35: #{tpu_custom_call.1} parent=31 // pred_region
          %202 = dma.done %s195, 128
        $region36: #{tpu_custom_call.1} parent=31 // pred_fallthru
          _
        %s203 = sand.u32 %s42, 1
        %s204 = scalar_lea.sflag [#allocation3], %s203
        %s205 = sand.u32 %s42, 1
        %s206 = smul.addr %s205, 8
        %s207 = scalar_lea.vmem [#allocation2], %s206
        %p208 = pneg %p55
        %p209 = pneg %p52
        %p210 = pneg %p76
        %p211 = pneg %p73
        %s212 = smul.u32 2, %s25
        %p213 = scmp.lt.s32.totalorder %s24, 1
        %s214 = scalar_select %p213, %s24, 1
        %p215 = scmp.lt.s32.totalorder %s212, 1
        %s216 = scalar_select %p215, %s212, 1
        %s217 = smul.addr %s214, 2
        %s218 = sadd.s32 %s216, %s217
        %s219 = scalar_lea.vmem %s2, %s218
        %p220 = pneg %p104
        %p221 = pneg %p101
        %p222 = pneg %p132
        %p223 = pneg %p129
        %s224 = sand.u32 %s119, 1
        %s225 = scalar_lea.sflag [#allocation4], %s224
        %s226 = sand.u32 %s119, 1
        %s227 = smul.addr %s226, 8
        %s228 = scalar_lea.vmem [#allocation5], %s227
        %s229 = smul.u32 2, %s25
        %s230 = smul.u32 2, %s25
        %p231 = scmp.lt.s32.totalorder %s24, 1
        %s232 = scalar_select %p231, %s24, 1
        %p233 = scmp.lt.s32.totalorder %s230, 1
        %s234 = scalar_select %p233, %s230, 1
        %s235 = smul.addr %s232, 2
        %s236 = sadd.s32 %s234, %s235
        %s237 = scalar_lea.vmem %s2, %s236
        %s238 = smul.u32 2, %s25
        %s239 = smul.u32 2, %s25
        %v240 = vld [vmem:[%s198] sm:$0xff]
        %v241 = vld [vmem:[%s1] sm:$0xf]
        %v242 = vld [vmem:[%s237] sm:$0x3]
        %244 = vset.pattern.permute.xlu0 0
        %245 = vperm.xlu0 %244, %v241
        %v246 = vpop.permute.xlu0 %245
        %v249 = vlaneseq
        %v250 = vshrl.u32 %v249, 7
        %v251 = vsub.s32 0, %v250
        %v252 = vrot.slane %v242, %v251
        %v253 = vlaneseq
        %v254 = vshrl.u32 %v253, 7
        %v255 = vsub.s32 1, %v254
        %v256 = vrot.slane %v242, %v255
        %v259 = vmul.f32 %v246, %v252
        %v260 = vmul.f32 %v246, %v256
        %v263 = vcombine.low %v259, %v260
        %v265 = vadd.f32 %v240, %v263
        %266 = vst [vmem:[%s228] sm:$0xff] %v265
        %s267 = sand.u32 %s119, 1
        %s268 = scalar_lea.sflag [#allocation4], %s267
        %s269 = sand.u32 %s119, 1
        %s270 = smul.addr %s269, 8
        %s271 = scalar_lea.vmem [#allocation5], %s270
        // Predicated region
        $region37: #{tpu_custom_call.1} parent=31 // pred_check
          %p272 = pneg %p129
        $region38: #{tpu_custom_call.1} parent=31 // pred_check_branch
          %274 = sbr.rel (%p272) target = $region40
        $region39: #{tpu_custom_call.1} parent=31 // pred_region
          %s275 = smul.u32 2, %s25
          %s277 = ssub.s32 128, 128
          %278 = vsyncadd %s268, %s277
          %s279 = smul.addr %s24, 2
          %s280 = sadd.s32 %s275, %s279
          %s281 = smul.addr %s280, 64
          %s282 = scalar_lea.hbm %s3, %s281
          %s284 = sshll.u32 %s271, 4
          %s285 = int_to_ptr.vmem [resolvable:$true] %s284
          %287 = dma.vmem_to_hbm [thread:$0]  %s285, 128, %s282, %s268
        $region40: #{tpu_custom_call.1} parent=31 // pred_fallthru
          _
      $region32: #{tpu_custom_call.1} parent=5 // pred_fallthru
        _
      %p288 = scmp.le.s32.totalorder 2, %s15
      // Predicated region
      $region41: #{tpu_custom_call.1} parent=5 // pred_check
        %p289 = pneg %p288
      $region42: #{tpu_custom_call.1} parent=5 // pred_check_branch
        %291 = sbr.rel (%p289) target = $region44
      $region43: #{tpu_custom_call.1} parent=5 // pred_region
        %s292 = ssub.s32 %s15, 2
        // Predicated region
        $region45: #{tpu_custom_call.1} parent=43 // pred_check
          %p293 = pneg %p135
        $region46: #{tpu_custom_call.1} parent=43 // pred_check_branch
          %295 = sbr.rel (%p293) target = $region48
        $region47: #{tpu_custom_call.1} parent=43 // pred_region
          %s296 = sand.u32 %s120, 1
          %s297 = scalar_lea.sflag [#allocation4], %s296
          %s298 = sand.u32 %s120, 1
          %s299 = smul.addr %s298, 8
          %s300 = scalar_lea.vmem [#allocation5], %s299
          %301 = dma.done %s297, 128
        $region48: #{tpu_custom_call.1} parent=43 // pred_fallthru
          _
      $region44: #{tpu_custom_call.1} parent=5 // pred_fallthru
        _
    $region6: #{tpu_custom_call.1} parent=1 // loop_footer
      %s19 = sadd.s32 1, %s15
    $region7: #{tpu_custom_call.1} parent=1 // loop_footer_branch
      %14 = sbr.rel target = $region3
    $region8: #{tpu_custom_call.1} parent=1 // loop_exit
      _
    %302 = vsyncpa [#allocation3], 1
    %s303 = scalar_lea.sflag [#allocation3], 1
    %304 = vsyncpa %s303, 1
    %305 = vsyncpa [#allocation4], 1
    %s306 = scalar_lea.sflag [#allocation4], 1
    %307 = vsyncpa %s306, 1

</llo_original>
